<compile_context>
chip_gen: v6e
topology: v6e:2x2x1
jax: 0.10.0
libtpu: 0.0.40
codegen_flags: <defaults>
</compile_context>

<pallas_src>
import functools

import numpy as np
import jax
import jax.numpy as jnp
from jax.experimental import pallas as pl
from jax.experimental.pallas import tpu as pltpu

_HALF_LOG_2PI = 0.5 * float(np.log(2.0 * np.pi))


def _round_up(n, m):
    return ((n + m - 1) // m) * m


def _chip_config():
    """(num_hw_splits, per-step VMEM working-set budget, vmem_limit_bytes or None)."""
    try:
        kind = jax.devices()[0].device_kind.lower()
    except Exception:
        kind = ""
    if "v7" in kind:
        # 2 TensorCores, 64 MiB VMEM per TC: split the parallel HW axis, modest tiles.
        return 2, 24 * 1024 * 1024, 48 * 1024 * 1024
    if "v6" in kind:
        # 1 TC, 128 MiB VMEM, mem-bound: biggest lane-dense tile wins.
        return 1, 48 * 1024 * 1024, 100 * 1024 * 1024
    if "v5" in kind and ("lite" in kind or "v5e" in kind):
        return 1, 48 * 1024 * 1024, 100 * 1024 * 1024
    # Unknown / older part: stay under the smallest default scoped-VMEM and split the
    # parallel axis in case of a megacore chip.
    return 2, 12 * 1024 * 1024, None


def _spatial_gaussian_kernel(x_ref, mean_ref, ls_ref, o_ref, a_sc, c_sc,
                             *, n_batch, n_in):
    # Block shapes:
    #   x_ref:    (n_batch, n_in, T)   -- batch tile of inputs (f32 or bf16)
    #   mean_ref: (n_in, n_out, T)     -- params, channel-major layout
    #   ls_ref:   (n_in, n_out, T)
    #   o_ref:    (n_batch, n_out, T)  -- f32 output
    #   a_sc/c_sc:(n_in, n_out, T)     -- f32 VMEM scratch, persists across grid steps

    # Batch-invariant precompute, once per HW tile (batch is the innermost grid axis,
    # so program_id(1) == 0 exactly when a new HW tile's params arrive).
    @pl.when(pl.program_id(1) == 0)
    def _fill_param_scratch():
        ls = ls_ref[...].astype(jnp.float32)
        a_sc[...] = -0.5 * jnp.exp(-2.0 * ls)      # = -1 / (2 * var)
        c_sc[...] = -ls - _HALF_LOG_2PI

    # Only one (n_out, T) accumulator live at any time.
    for b in range(n_batch):
        acc = None
        for c in range(n_in):
            x_row = x_ref[b, c:c + 1, :].astype(jnp.float32)   # (1, T)
            nan_row = jnp.isnan(x_row)                         # mask from x (cheap)
            m_c = mean_ref[c].astype(jnp.float32)              # (n_out, T) slab
            d = x_row - m_c                                    # sublane broadcast
            lp = d * d * a_sc[c] + c_sc[c]                     # log N(x; mean, scale^2)
            lp = jnp.where(nan_row, 0.0, lp)                   # marginalise NaN inputs
            acc = lp if acc is None else acc + lp
        o_ref[b] = acc.astype(o_ref.dtype)


def prepare_gaussian_params(mean, log_scale, storage_dtype=jnp.float32):
    """One-time layout prep (do this at module init, NOT per forward).

    (K, C, H, W) params -> channel-major (C, K, HWp) with HW padded to a multiple of
    128 (lane-dense loads/stores).  storage_dtype=jnp.bfloat16 halves HBM traffic on
    bandwidth-bound chips; arithmetic stays f32 in-kernel.
    """
    K, C, H, W = mean.shape
    HW = H * W
    HWp = _round_up(HW, 128)

    def prep(p):
        p = jnp.transpose(p.reshape(K, C, HW), (1, 0, 2)).astype(storage_dtype)
        if HWp != HW:
            p = jnp.pad(p, ((0, 0), (0, 0), (0, HWp - HW)))
        return p

    return prep(mean), prep(log_scale)


def spatial_gaussian_forward(x, mean_p, ls_p, *, single_buffer_params=None,
                             max_tile_hw=None):
    """x: (B, C, H, W); mean_p/ls_p from prepare_gaussian_params -> (B, K, H, W) f32."""
    B, C, H, W = x.shape
    Cp, K, HWp = mean_p.shape
    HW = H * W
    assert Cp == C and ls_p.shape == mean_p.shape
    assert HWp == _round_up(HW, 128), "params were prepared for a different spatial size"

    storage_dtype = mean_p.dtype
    xf = x.reshape(B, C, HW).astype(storage_dtype)
    if HWp != HW:
        xf = jnp.pad(xf, ((0, 0), (0, 0), (0, HWp - HW)))

    n_split, budget, vmem_limit = _chip_config()

    # Batch tile: whole batch in one grid step when B <= 8, else largest divisor <= 8.
    tb = min(B, 8)
    while B % tb:
        tb -= 1
    grid_b = B // tb

    # Param blocks are revisited across inner batch steps; single-buffer them only
    # then (with a single batch step, Buffered(1) would just serialize the DMA).
    if single_buffer_params is None:
        single_buffer_params = grid_b > 1
    nbuf_param = 1 if (single_buffer_params and grid_b > 1) else 2

    # VMEM working set per lane position of t_hw, with sublane padding of the
    # second-minor dims (f32 -> multiple of 8, bf16 -> 16).
    in_item = jnp.dtype(storage_dtype).itemsize
    sub_in = (8 * 4) // in_item
    c_in, k_in = _round_up(C, sub_in), _round_up(K, sub_in)
    k_f32 = _round_up(K, 8)

    def tile_bytes(t):
        return t * (2 * tb * c_in * in_item            # x block, double-buffered
                    + nbuf_param * 2 * C * k_in * in_item  # mean + log_scale blocks
                    + 2 * tb * k_f32 * 4               # out block, double-buffered
                    + 2 * C * k_f32 * 4)               # a_sc + c_sc scratch

    # HW tile: largest multiple of 128 dividing HWp that fits the budget; on 2-TC
    # chips cap it so the parallel HW axis has >= n_split tiles.
    max_t = HWp
    if max_tile_hw is not None:
        max_t = min(max_t, max(128, (max_tile_hw // 128) * 128))
    if n_split >= 2 and HWp >= n_split * 128:
        max_t = min(max_t, (HWp // n_split // 128) * 128)
    n128 = HWp // 128
    t_hw = 128
    for d in range(1, n128 + 1):
        if n128 % d == 0:
            t = 128 * d
            if t <= max_t and tile_bytes(t) <= budget:
                t_hw = t

    grid = (HWp // t_hw, grid_b)                       # batch is the inner (fast) axis

    param_kwargs = dict(pipeline_mode=pl.Buffered(1)) if nbuf_param == 1 else {}
    in_specs = [
        pl.BlockSpec((tb, C, t_hw), lambda h, b: (b, 0, h)),               # x
        pl.BlockSpec((C, K, t_hw), lambda h, b: (0, 0, h), **param_kwargs),  # mean
        pl.BlockSpec((C, K, t_hw), lambda h, b: (0, 0, h), **param_kwargs),  # log_scale
    ]

    cost = pl.CostEstimate(
        flops=6 * B * C * K * HWp,
        transcendentals=C * K * HWp,
        bytes_accessed=(B * C + 2 * C * K) * HWp * in_item + B * K * HWp * 4,
    )

    cp_kwargs = dict(dimension_semantics=("parallel", "arbitrary"))
    if vmem_limit is not None:
        cp_kwargs["vmem_limit_bytes"] = vmem_limit

    kernel = functools.partial(_spatial_gaussian_kernel, n_batch=tb, n_in=C)

    out = pl.pallas_call(
        kernel,
        out_shape=jax.ShapeDtypeStruct((B, K, HWp), jnp.float32),
        grid_spec=pltpu.PrefetchScalarGridSpec(
            num_scalar_prefetch=0,
            grid=grid,
            in_specs=in_specs,
            out_specs=pl.BlockSpec((tb, K, t_hw), lambda h, b: (b, 0, h)),
            scratch_shapes=[pltpu.VMEM((C, K, t_hw), jnp.float32)] * 2,
        ),
        compiler_params=pltpu.CompilerParams(**cp_kwargs),
        cost_estimate=cost,
    )(xf, mean_p, ls_p)

    return out[:, :, :HW].reshape(B, K, H, W)


def _reference_forward(x, mean, log_scale):
    # Pure-JAX mirror of the PyTorch forward (mask isnan of the log-prob).
    xb = x[:, None]                                    # (B, 1, C, H, W)
    var = jnp.exp(2.0 * log_scale)
    lp = -(xb - mean) ** 2 / (2.0 * var) - log_scale - _HALF_LOG_2PI
    lp = jnp.where(jnp.isnan(lp), 0.0, lp)
    return jnp.sum(lp, axis=2)                         # (B, K, H, W)


if __name__ == "__main__":
    # TODO(synk): the torch log_prob's host-side NaN check on mean/log_scale
    # (print + exit(0)) has no in-kernel equivalent; parameters here are finite.

    def run_case(B, C, H, W, K, *, seed, storage_dtype=jnp.float32,
                 max_tile_hw=None, single_buffer_params=None):
        key = jax.random.PRNGKey(seed)
        kx, km, ks = jax.random.split(key, 3)
        x = jax.random.uniform(kx, (B, C, H, W), jnp.float32, minval=-1.0, maxval=1.0)
        x = x.at[0, min(1, C - 1), H // 2, W // 3].set(jnp.nan)   # marginalisation path
        mean = 0.5 * jax.random.normal(km, (K, C, H, W), jnp.float32)
        log_scale = 0.1 * jax.random.normal(ks, (K, C, H, W), jnp.float32)

        mean_p, ls_p = prepare_gaussian_params(mean, log_scale, storage_dtype)
        out = spatial_gaussian_forward(x, mean_p, ls_p,
                                       max_tile_hw=max_tile_hw,
                                       single_buffer_params=single_buffer_params)
        out = jax.block_until_ready(out)

        # Reference sees the same storage rounding the kernel does.
        xr = x.astype(storage_dtype).astype(jnp.float32)
        mr = mean.astype(storage_dtype).astype(jnp.float32)
        sr = log_scale.astype(storage_dtype).astype(jnp.float32)
        ref = _reference_forward(xr, mr, sr)

        assert out.shape == (B, K, H, W)
        np.testing.assert_allclose(np.asarray(out), np.asarray(ref),
                                   rtol=1e-5, atol=1e-5)

    # 1) the module's toy size: in_size=(4,16,16), out_channels=4, batch=2
    run_case(2, 4, 16, 16, 4, seed=0)
    # 2) multi HW-tile x multi batch-tile grid (exercises param-scratch reuse across
    #    the inner batch steps; params kept double-buffered in this configuration)
    run_case(16, 3, 12, 12, 6, seed=1, max_tile_hw=128, single_buffer_params=False)
    # 3) bf16 HBM storage (halves bandwidth on v5e/v6e); arithmetic/output stay f32
    run_case(2, 4, 16, 16, 4, seed=2, storage_dtype=jnp.bfloat16)

    print("KERNEL_OK")
</pallas_src>

<mosaic_0001>
module attributes {stable_mosaic.version = 11 : i64} {
  func.func @_spatial_gaussian_kernel(%arg0: i32, %arg1: i32, %arg2: memref<2x4x128xf32, #tpu.memory_space<vmem>>, %arg3: memref<4x4x128xf32, #tpu.memory_space<vmem>>, %arg4: memref<4x4x128xf32, #tpu.memory_space<vmem>>, %arg5: memref<2x4x128xf32, #tpu.memory_space<vmem>>, %arg6: memref<4x4x128xf32, #tpu.memory_space<vmem>>, %arg7: memref<4x4x128xf32, #tpu.memory_space<vmem>>) attributes {dimension_semantics = [#tpu.dimension_semantics<parallel>, #tpu.dimension_semantics<arbitrary>], iteration_bounds = array<i64: 2, 1>, scalar_prefetch = 0 : i64, scratch_operands = 2 : i64, tpu.core_type = #tpu.core_type<tc>, window_params = [{transform_indices = @transform_0, window_bounds = array<i64: 2, 4, 128>}, {transform_indices = @transform_1, window_bounds = array<i64: 4, 4, 128>}, {transform_indices = @transform_2, window_bounds = array<i64: 4, 4, 128>}, {transform_indices = @transform_3, window_bounds = array<i64: 2, 4, 128>}]} {
    %c0_i32 = arith.constant 0 : i32
    %0 = arith.cmpi eq, %arg1, %c0_i32 : i32
    %1 = arith.extui %0 : i1 to i32
    %c0_i32_0 = arith.constant 0 : i32
    %2 = arith.cmpi ne, %1, %c0_i32_0 : i32
    scf.if %2 {
      %c0_106 = arith.constant 0 : index
      %c0_107 = arith.constant 0 : index
      %c0_108 = arith.constant 0 : index
      %159 = vector.load %arg4[%c0_106, %c0_107, %c0_108] : memref<4x4x128xf32, #tpu.memory_space<vmem>>, vector<4x4x128xf32>
      %cst_109 = arith.constant -2.000000e+00 : f32
      %160 = vector.broadcast %cst_109 : f32 to vector<4x4x128xf32>
      %161 = arith.mulf %160, %159 : vector<4x4x128xf32>
      %162 = math.exp %161 : vector<4x4x128xf32>
      %cst_110 = arith.constant -5.000000e-01 : f32
      %163 = vector.broadcast %cst_110 : f32 to vector<4x4x128xf32>
      %164 = arith.mulf %163, %162 : vector<4x4x128xf32>
      %c0_111 = arith.constant 0 : index
      %c0_112 = arith.constant 0 : index
      %c0_113 = arith.constant 0 : index
      %165 = vector.load %arg6[%c0_111, %c0_112, %c0_113] : memref<4x4x128xf32, #tpu.memory_space<vmem>>, vector<4x4x128xf32>
      tpu.vector_store %arg6[%c0_111, %c0_112, %c0_113], %164 {strides = array<i32>} : memref<4x4x128xf32, #tpu.memory_space<vmem>>, vector<4x4x128xf32>,
      %cst_114 = arith.constant 0.000000e+00 : f32
      %166 = vector.broadcast %cst_114 : f32 to vector<4x4x128xf32>
      %167 = arith.subf %166, %159 : vector<4x4x128xf32>
      %cst_115 = arith.constant 0.918938517 : f32
      %168 = vector.broadcast %cst_115 : f32 to vector<4x4x128xf32>
      %169 = arith.subf %167, %168 : vector<4x4x128xf32>
      %c0_116 = arith.constant 0 : index
      %c0_117 = arith.constant 0 : index
      %c0_118 = arith.constant 0 : index
      %170 = vector.load %arg7[%c0_116, %c0_117, %c0_118] : memref<4x4x128xf32, #tpu.memory_space<vmem>>, vector<4x4x128xf32>
      tpu.vector_store %arg7[%c0_116, %c0_117, %c0_118], %169 {strides = array<i32>} : memref<4x4x128xf32, #tpu.memory_space<vmem>>, vector<4x4x128xf32>,
    } else {
    }
    %c0 = arith.constant 0 : index
    %c0_1 = arith.constant 0 : index
    %c0_2 = arith.constant 0 : index
    %3 = vector.load %arg2[%c0, %c0_1, %c0_2] : memref<2x4x128xf32, #tpu.memory_space<vmem>>, vector<1x1x128xf32>
    %4 = vector.shape_cast %3 : vector<1x1x128xf32> to vector<1x128xf32>
    %5 = arith.cmpf one, %4, %4 : vector<1x128xf32>
    %c0_3 = arith.constant 0 : index
    %c0_4 = arith.constant 0 : index
    %c0_5 = arith.constant 0 : index
    %6 = vector.load %arg3[%c0_3, %c0_4, %c0_5] : memref<4x4x128xf32, #tpu.memory_space<vmem>>, vector<1x4x128xf32>
    %7 = vector.shape_cast %6 : vector<1x4x128xf32> to vector<4x128xf32>
    %8 = vector.broadcast %4 : vector<1x128xf32> to vector<4x128xf32>
    %9 = arith.subf %8, %7 : vector<4x128xf32>
    %10 = arith.mulf %9, %9 : vector<4x128xf32>
    %c0_6 = arith.constant 0 : index
    %c0_7 = arith.constant 0 : index
    %c0_8 = arith.constant 0 : index
    %11 = vector.load %arg6[%c0_6, %c0_7, %c0_8] : memref<4x4x128xf32, #tpu.memory_space<vmem>>, vector<1x4x128xf32>
    %12 = vector.shape_cast %11 : vector<1x4x128xf32> to vector<4x128xf32>
    %13 = arith.mulf %10, %12 : vector<4x128xf32>
    %c0_9 = arith.constant 0 : index
    %c0_10 = arith.constant 0 : index
    %c0_11 = arith.constant 0 : index
    %14 = vector.load %arg7[%c0_9, %c0_10, %c0_11] : memref<4x4x128xf32, #tpu.memory_space<vmem>>, vector<1x4x128xf32>
    %15 = vector.shape_cast %14 : vector<1x4x128xf32> to vector<4x128xf32>
    %16 = arith.addf %13, %15 : vector<4x128xf32>
    %cst = arith.constant 0.000000e+00 : f32
    %17 = vector.shape_cast %5 : vector<1x128xi1> to vector<1x128xi1>
    %18 = vector.broadcast %17 : vector<1x128xi1> to vector<4x128xi1>
    %19 = vector.broadcast %cst : f32 to vector<4x128xf32>
    %20 = arith.select %18, %19, %16 : vector<4x128xi1>, vector<4x128xf32>
    %c0_12 = arith.constant 0 : index
    %c1 = arith.constant 1 : index
    %c0_13 = arith.constant 0 : index
    %21 = vector.load %arg2[%c0_12, %c1, %c0_13] : memref<2x4x128xf32, #tpu.memory_space<vmem>>, vector<1x1x128xf32>
    %22 = vector.shape_cast %21 : vector<1x1x128xf32> to vector<1x128xf32>
    %23 = arith.cmpf one, %22, %22 : vector<1x128xf32>
    %c1_14 = arith.constant 1 : index
    %c0_15 = arith.constant 0 : index
    %c0_16 = arith.constant 0 : index
    %24 = vector.load %arg3[%c1_14, %c0_15, %c0_16] : memref<4x4x128xf32, #tpu.memory_space<vmem>>, vector<1x4x128xf32>
    %25 = vector.shape_cast %24 : vector<1x4x128xf32> to vector<4x128xf32>
    %26 = vector.broadcast %22 : vector<1x128xf32> to vector<4x128xf32>
    %27 = arith.subf %26, %25 : vector<4x128xf32>
    %28 = arith.mulf %27, %27 : vector<4x128xf32>
    %c1_17 = arith.constant 1 : index
    %c0_18 = arith.constant 0 : index
    %c0_19 = arith.constant 0 : index
    %29 = vector.load %arg6[%c1_17, %c0_18, %c0_19] : memref<4x4x128xf32, #tpu.memory_space<vmem>>, vector<1x4x128xf32>
    %30 = vector.shape_cast %29 : vector<1x4x128xf32> to vector<4x128xf32>
    %31 = arith.mulf %28, %30 : vector<4x128xf32>
    %c1_20 = arith.constant 1 : index
    %c0_21 = arith.constant 0 : index
    %c0_22 = arith.constant 0 : index
    %32 = vector.load %arg7[%c1_20, %c0_21, %c0_22] : memref<4x4x128xf32, #tpu.memory_space<vmem>>, vector<1x4x128xf32>
    %33 = vector.shape_cast %32 : vector<1x4x128xf32> to vector<4x128xf32>
    %34 = arith.addf %31, %33 : vector<4x128xf32>
    %cst_23 = arith.constant 0.000000e+00 : f32
    %35 = vector.shape_cast %23 : vector<1x128xi1> to vector<1x128xi1>
    %36 = vector.broadcast %35 : vector<1x128xi1> to vector<4x128xi1>
    %37 = vector.broadcast %cst_23 : f32 to vector<4x128xf32>
    %38 = arith.select %36, %37, %34 : vector<4x128xi1>, vector<4x128xf32>
    %39 = arith.addf %20, %38 : vector<4x128xf32>
    %c0_24 = arith.constant 0 : index
    %c2 = arith.constant 2 : index
    %c0_25 = arith.constant 0 : index
    %40 = vector.load %arg2[%c0_24, %c2, %c0_25] : memref<2x4x128xf32, #tpu.memory_space<vmem>>, vector<1x1x128xf32>
    %41 = vector.shape_cast %40 : vector<1x1x128xf32> to vector<1x128xf32>
    %42 = arith.cmpf one, %41, %41 : vector<1x128xf32>
    %c2_26 = arith.constant 2 : index
    %c0_27 = arith.constant 0 : index
    %c0_28 = arith.constant 0 : index
    %43 = vector.load %arg3[%c2_26, %c0_27, %c0_28] : memref<4x4x128xf32, #tpu.memory_space<vmem>>, vector<1x4x128xf32>
    %44 = vector.shape_cast %43 : vector<1x4x128xf32> to vector<4x128xf32>
    %45 = vector.broadcast %41 : vector<1x128xf32> to vector<4x128xf32>
    %46 = arith.subf %45, %44 : vector<4x128xf32>
    %47 = arith.mulf %46, %46 : vector<4x128xf32>
    %c2_29 = arith.constant 2 : index
    %c0_30 = arith.constant 0 : index
    %c0_31 = arith.constant 0 : index
    %48 = vector.load %arg6[%c2_29, %c0_30, %c0_31] : memref<4x4x128xf32, #tpu.memory_space<vmem>>, vector<1x4x128xf32>
    %49 = vector.shape_cast %48 : vector<1x4x128xf32> to vector<4x128xf32>
    %50 = arith.mulf %47, %49 : vector<4x128xf32>
    %c2_32 = arith.constant 2 : index
    %c0_33 = arith.constant 0 : index
    %c0_34 = arith.constant 0 : index
    %51 = vector.load %arg7[%c2_32, %c0_33, %c0_34] : memref<4x4x128xf32, #tpu.memory_space<vmem>>, vector<1x4x128xf32>
    %52 = vector.shape_cast %51 : vector<1x4x128xf32> to vector<4x128xf32>
    %53 = arith.addf %50, %52 : vector<4x128xf32>
    %cst_35 = arith.constant 0.000000e+00 : f32
    %54 = vector.shape_cast %42 : vector<1x128xi1> to vector<1x128xi1>
    %55 = vector.broadcast %54 : vector<1x128xi1> to vector<4x128xi1>
    %56 = vector.broadcast %cst_35 : f32 to vector<4x128xf32>
    %57 = arith.select %55, %56, %53 : vector<4x128xi1>, vector<4x128xf32>
    %58 = arith.addf %39, %57 : vector<4x128xf32>
    %c0_36 = arith.constant 0 : index
    %c3 = arith.constant 3 : index
    %c0_37 = arith.constant 0 : index
    %59 = vector.load %arg2[%c0_36, %c3, %c0_37] : memref<2x4x128xf32, #tpu.memory_space<vmem>>, vector<1x1x128xf32>
    %60 = vector.shape_cast %59 : vector<1x1x128xf32> to vector<1x128xf32>
    %61 = arith.cmpf one, %60, %60 : vector<1x128xf32>
    %c3_38 = arith.constant 3 : index
    %c0_39 = arith.constant 0 : index
    %c0_40 = arith.constant 0 : index
    %62 = vector.load %arg3[%c3_38, %c0_39, %c0_40] : memref<4x4x128xf32, #tpu.memory_space<vmem>>, vector<1x4x128xf32>
    %63 = vector.shape_cast %62 : vector<1x4x128xf32> to vector<4x128xf32>
    %64 = vector.broadcast %60 : vector<1x128xf32> to vector<4x128xf32>
    %65 = arith.subf %64, %63 : vector<4x128xf32>
    %66 = arith.mulf %65, %65 : vector<4x128xf32>
    %c3_41 = arith.constant 3 : index
    %c0_42 = arith.constant 0 : index
    %c0_43 = arith.constant 0 : index
    %67 = vector.load %arg6[%c3_41, %c0_42, %c0_43] : memref<4x4x128xf32, #tpu.memory_space<vmem>>, vector<1x4x128xf32>
    %68 = vector.shape_cast %67 : vector<1x4x128xf32> to vector<4x128xf32>
    %69 = arith.mulf %66, %68 : vector<4x128xf32>
    %c3_44 = arith.constant 3 : index
    %c0_45 = arith.constant 0 : index
    %c0_46 = arith.constant 0 : index
    %70 = vector.load %arg7[%c3_44, %c0_45, %c0_46] : memref<4x4x128xf32, #tpu.memory_space<vmem>>, vector<1x4x128xf32>
    %71 = vector.shape_cast %70 : vector<1x4x128xf32> to vector<4x128xf32>
    %72 = arith.addf %69, %71 : vector<4x128xf32>
    %cst_47 = arith.constant 0.000000e+00 : f32
    %73 = vector.shape_cast %61 : vector<1x128xi1> to vector<1x128xi1>
    %74 = vector.broadcast %73 : vector<1x128xi1> to vector<4x128xi1>
    %75 = vector.broadcast %cst_47 : f32 to vector<4x128xf32>
    %76 = arith.select %74, %75, %72 : vector<4x128xi1>, vector<4x128xf32>
    %77 = arith.addf %58, %76 : vector<4x128xf32>
    %c0_48 = arith.constant 0 : index
    %c0_49 = arith.constant 0 : index
    %c0_50 = arith.constant 0 : index
    %78 = vector.load %arg5[%c0_48, %c0_49, %c0_50] : memref<2x4x128xf32, #tpu.memory_space<vmem>>, vector<1x4x128xf32>
    %79 = vector.shape_cast %78 : vector<1x4x128xf32> to vector<4x128xf32>
    %80 = vector.shape_cast %77 : vector<4x128xf32> to vector<1x4x128xf32>
    tpu.vector_store %arg5[%c0_48, %c0_49, %c0_50], %80 {strides = array<i32>} : memref<2x4x128xf32, #tpu.memory_space<vmem>>, vector<1x4x128xf32>,
    %c1_51 = arith.constant 1 : index
    %c0_52 = arith.constant 0 : index
    %c0_53 = arith.constant 0 : index
    %81 = vector.load %arg2[%c1_51, %c0_52, %c0_53] : memref<2x4x128xf32, #tpu.memory_space<vmem>>, vector<1x1x128xf32>
    %82 = vector.shape_cast %81 : vector<1x1x128xf32> to vector<1x128xf32>
    %83 = arith.cmpf one, %82, %82 : vector<1x128xf32>
    %c0_54 = arith.constant 0 : index
    %c0_55 = arith.constant 0 : index
    %c0_56 = arith.constant 0 : index
    %84 = vector.load %arg3[%c0_54, %c0_55, %c0_56] : memref<4x4x128xf32, #tpu.memory_space<vmem>>, vector<1x4x128xf32>
    %85 = vector.shape_cast %84 : vector<1x4x128xf32> to vector<4x128xf32>
    %86 = vector.broadcast %82 : vector<1x128xf32> to vector<4x128xf32>
    %87 = arith.subf %86, %85 : vector<4x128xf32>
    %88 = arith.mulf %87, %87 : vector<4x128xf32>
    %c0_57 = arith.constant 0 : index
    %c0_58 = arith.constant 0 : index
    %c0_59 = arith.constant 0 : index
    %89 = vector.load %arg6[%c0_57, %c0_58, %c0_59] : memref<4x4x128xf32, #tpu.memory_space<vmem>>, vector<1x4x128xf32>
    %90 = vector.shape_cast %89 : vector<1x4x128xf32> to vector<4x128xf32>
    %91 = arith.mulf %88, %90 : vector<4x128xf32>
    %c0_60 = arith.constant 0 : index
    %c0_61 = arith.constant 0 : index
    %c0_62 = arith.constant 0 : index
    %92 = vector.load %arg7[%c0_60, %c0_61, %c0_62] : memref<4x4x128xf32, #tpu.memory_space<vmem>>, vector<1x4x128xf32>
    %93 = vector.shape_cast %92 : vector<1x4x128xf32> to vector<4x128xf32>
    %94 = arith.addf %91, %93 : vector<4x128xf32>
    %cst_63 = arith.constant 0.000000e+00 : f32
    %95 = vector.shape_cast %83 : vector<1x128xi1> to vector<1x128xi1>
    %96 = vector.broadcast %95 : vector<1x128xi1> to vector<4x128xi1>
    %97 = vector.broadcast %cst_63 : f32 to vector<4x128xf32>
    %98 = arith.select %96, %97, %94 : vector<4x128xi1>, vector<4x128xf32>
    %c1_64 = arith.constant 1 : index
    %c1_65 = arith.constant 1 : index
    %c0_66 = arith.constant 0 : index
    %99 = vector.load %arg2[%c1_64, %c1_65, %c0_66] : memref<2x4x128xf32, #tpu.memory_space<vmem>>, vector<1x1x128xf32>
    %100 = vector.shape_cast %99 : vector<1x1x128xf32> to vector<1x128xf32>
    %101 = arith.cmpf one, %100, %100 : vector<1x128xf32>
    %c1_67 = arith.constant 1 : index
    %c0_68 = arith.constant 0 : index
    %c0_69 = arith.constant 0 : index
    %102 = vector.load %arg3[%c1_67, %c0_68, %c0_69] : memref<4x4x128xf32, #tpu.memory_space<vmem>>, vector<1x4x128xf32>
    %103 = vector.shape_cast %102 : vector<1x4x128xf32> to vector<4x128xf32>
    %104 = vector.broadcast %100 : vector<1x128xf32> to vector<4x128xf32>
    %105 = arith.subf %104, %103 : vector<4x128xf32>
    %106 = arith.mulf %105, %105 : vector<4x128xf32>
    %c1_70 = arith.constant 1 : index
    %c0_71 = arith.constant 0 : index
    %c0_72 = arith.constant 0 : index
    %107 = vector.load %arg6[%c1_70, %c0_71, %c0_72] : memref<4x4x128xf32, #tpu.memory_space<vmem>>, vector<1x4x128xf32>
    %108 = vector.shape_cast %107 : vector<1x4x128xf32> to vector<4x128xf32>
    %109 = arith.mulf %106, %108 : vector<4x128xf32>
    %c1_73 = arith.constant 1 : index
    %c0_74 = arith.constant 0 : index
    %c0_75 = arith.constant 0 : index
    %110 = vector.load %arg7[%c1_73, %c0_74, %c0_75] : memref<4x4x128xf32, #tpu.memory_space<vmem>>, vector<1x4x128xf32>
    %111 = vector.shape_cast %110 : vector<1x4x128xf32> to vector<4x128xf32>
    %112 = arith.addf %109, %111 : vector<4x128xf32>
    %cst_76 = arith.constant 0.000000e+00 : f32
    %113 = vector.shape_cast %101 : vector<1x128xi1> to vector<1x128xi1>
    %114 = vector.broadcast %113 : vector<1x128xi1> to vector<4x128xi1>
    %115 = vector.broadcast %cst_76 : f32 to vector<4x128xf32>
    %116 = arith.select %114, %115, %112 : vector<4x128xi1>, vector<4x128xf32>
    %117 = arith.addf %98, %116 : vector<4x128xf32>
    %c1_77 = arith.constant 1 : index
    %c2_78 = arith.constant 2 : index
    %c0_79 = arith.constant 0 : index
    %118 = vector.load %arg2[%c1_77, %c2_78, %c0_79] : memref<2x4x128xf32, #tpu.memory_space<vmem>>, vector<1x1x128xf32>
    %119 = vector.shape_cast %118 : vector<1x1x128xf32> to vector<1x128xf32>
    %120 = arith.cmpf one, %119, %119 : vector<1x128xf32>
    %c2_80 = arith.constant 2 : index
    %c0_81 = arith.constant 0 : index
    %c0_82 = arith.constant 0 : index
    %121 = vector.load %arg3[%c2_80, %c0_81, %c0_82] : memref<4x4x128xf32, #tpu.memory_space<vmem>>, vector<1x4x128xf32>
    %122 = vector.shape_cast %121 : vector<1x4x128xf32> to vector<4x128xf32>
    %123 = vector.broadcast %119 : vector<1x128xf32> to vector<4x128xf32>
    %124 = arith.subf %123, %122 : vector<4x128xf32>
    %125 = arith.mulf %124, %124 : vector<4x128xf32>
    %c2_83 = arith.constant 2 : index
    %c0_84 = arith.constant 0 : index
    %c0_85 = arith.constant 0 : index
    %126 = vector.load %arg6[%c2_83, %c0_84, %c0_85] : memref<4x4x128xf32, #tpu.memory_space<vmem>>, vector<1x4x128xf32>
    %127 = vector.shape_cast %126 : vector<1x4x128xf32> to vector<4x128xf32>
    %128 = arith.mulf %125, %127 : vector<4x128xf32>
    %c2_86 = arith.constant 2 : index
    %c0_87 = arith.constant 0 : index
    %c0_88 = arith.constant 0 : index
    %129 = vector.load %arg7[%c2_86, %c0_87, %c0_88] : memref<4x4x128xf32, #tpu.memory_space<vmem>>, vector<1x4x128xf32>
    %130 = vector.shape_cast %129 : vector<1x4x128xf32> to vector<4x128xf32>
    %131 = arith.addf %128, %130 : vector<4x128xf32>
    %cst_89 = arith.constant 0.000000e+00 : f32
    %132 = vector.shape_cast %120 : vector<1x128xi1> to vector<1x128xi1>
    %133 = vector.broadcast %132 : vector<1x128xi1> to vector<4x128xi1>
    %134 = vector.broadcast %cst_89 : f32 to vector<4x128xf32>
    %135 = arith.select %133, %134, %131 : vector<4x128xi1>, vector<4x128xf32>
    %136 = arith.addf %117, %135 : vector<4x128xf32>
    %c1_90 = arith.constant 1 : index
    %c3_91 = arith.constant 3 : index
    %c0_92 = arith.constant 0 : index
    %137 = vector.load %arg2[%c1_90, %c3_91, %c0_92] : memref<2x4x128xf32, #tpu.memory_space<vmem>>, vector<1x1x128xf32>
    %138 = vector.shape_cast %137 : vector<1x1x128xf32> to vector<1x128xf32>
    %139 = arith.cmpf one, %138, %138 : vector<1x128xf32>
    %c3_93 = arith.constant 3 : index
    %c0_94 = arith.constant 0 : index
    %c0_95 = arith.constant 0 : index
    %140 = vector.load %arg3[%c3_93, %c0_94, %c0_95] : memref<4x4x128xf32, #tpu.memory_space<vmem>>, vector<1x4x128xf32>
    %141 = vector.shape_cast %140 : vector<1x4x128xf32> to vector<4x128xf32>
    %142 = vector.broadcast %138 : vector<1x128xf32> to vector<4x128xf32>
    %143 = arith.subf %142, %141 : vector<4x128xf32>
    %144 = arith.mulf %143, %143 : vector<4x128xf32>
    %c3_96 = arith.constant 3 : index
    %c0_97 = arith.constant 0 : index
    %c0_98 = arith.constant 0 : index
    %145 = vector.load %arg6[%c3_96, %c0_97, %c0_98] : memref<4x4x128xf32, #tpu.memory_space<vmem>>, vector<1x4x128xf32>
    %146 = vector.shape_cast %145 : vector<1x4x128xf32> to vector<4x128xf32>
    %147 = arith.mulf %144, %146 : vector<4x128xf32>
    %c3_99 = arith.constant 3 : index
    %c0_100 = arith.constant 0 : index
    %c0_101 = arith.constant 0 : index
    %148 = vector.load %arg7[%c3_99, %c0_100, %c0_101] : memref<4x4x128xf32, #tpu.memory_space<vmem>>, vector<1x4x128xf32>
    %149 = vector.shape_cast %148 : vector<1x4x128xf32> to vector<4x128xf32>
    %150 = arith.addf %147, %149 : vector<4x128xf32>
    %cst_102 = arith.constant 0.000000e+00 : f32
    %151 = vector.shape_cast %139 : vector<1x128xi1> to vector<1x128xi1>
    %152 = vector.broadcast %151 : vector<1x128xi1> to vector<4x128xi1>
    %153 = vector.broadcast %cst_102 : f32 to vector<4x128xf32>
    %154 = arith.select %152, %153, %150 : vector<4x128xi1>, vector<4x128xf32>
    %155 = arith.addf %136, %154 : vector<4x128xf32>
    %c1_103 = arith.constant 1 : index
    %c0_104 = arith.constant 0 : index
    %c0_105 = arith.constant 0 : index
    %156 = vector.load %arg5[%c1_103, %c0_104, %c0_105] : memref<2x4x128xf32, #tpu.memory_space<vmem>>, vector<1x4x128xf32>
    %157 = vector.shape_cast %156 : vector<1x4x128xf32> to vector<4x128xf32>
    %158 = vector.shape_cast %155 : vector<4x128xf32> to vector<1x4x128xf32>
    tpu.vector_store %arg5[%c1_103, %c0_104, %c0_105], %158 {strides = array<i32>} : memref<2x4x128xf32, #tpu.memory_space<vmem>>, vector<1x4x128xf32>,
    return
  }
  func.func @transform_0(%arg0: i32, %arg1: i32) -> (i32, i32, i32) {
    %c0_i32 = arith.constant 0 : i32
    %c0_i32_0 = arith.constant 0 : i32
    return %arg1, %c0_i32, %arg0 : i32, i32, i32
  }
  func.func @transform_1(%arg0: i32, %arg1: i32) -> (i32, i32, i32) {
    %c0_i32 = arith.constant 0 : i32
    %c0_i32_0 = arith.constant 0 : i32
    %c0_i32_1 = arith.constant 0 : i32
    return %c0_i32, %c0_i32_0, %arg0 : i32, i32, i32
  }
  func.func @transform_2(%arg0: i32, %arg1: i32) -> (i32, i32, i32) {
    %c0_i32 = arith.constant 0 : i32
    %c0_i32_0 = arith.constant 0 : i32
    %c0_i32_1 = arith.constant 0 : i32
    return %c0_i32, %c0_i32_0, %arg0 : i32, i32, i32
  }
  func.func @transform_3(%arg0: i32, %arg1: i32) -> (i32, i32, i32) {
    %c0_i32 = arith.constant 0 : i32
    %c0_i32_0 = arith.constant 0 : i32
    return %arg1, %c0_i32, %arg0 : i32, i32, i32
  }
}

</mosaic_0001>

<llo_original>
// kernel: tpu_custom_call.1
$region0: #{tpu_custom_call.1}
  #allocation0 [shape = 'u32[]', space=smem, size = 0x4, offset = 0x4, fixed_abs, tag = 'smem constant byte address 0x4 - core index']
  #allocation1 [shape = 'u32[144,128]{1,0:T(1,128)}', space=vmem, size = 0x12000, scoped, tag = 'internal scratch']
  #allocation2 [shape = 'f32[4,4,128]{2,1,0:T(4,128)}', space=vmem, size = 0x2000, scoped, tag = 'scratch operand']
  #allocation3 [shape = 'f32[4,4,128]{2,1,0:T(4,128)}', space=vmem, size = 0x2000, scoped, tag = 'scratch operand']
  %s0 = inlined_call_operand.hbm [shape: f32[2,4,256], index: 0, kind: input, shape index: {}]
  %s1 = inlined_call_operand.hbm [shape: f32[4,4,256], index: 1, kind: input, shape index: {}]
  %s2 = inlined_call_operand.hbm [shape: f32[4,4,256], index: 2, kind: input, shape index: {}]
  %s3 = inlined_call_operand.hbm [shape: f32[2,4,256], index: 3, kind: output, shape index: {}]
  %s4 = sld [smem:[#allocation0]]
  $region61: #{tpu_custom_call.1} parent=0
    _
  %s6 = ssub.s32 1, %s4
  %s7 = scalar_select 0, %s6, %s4
  $region1: #{tpu_custom_call.1} parent=0
    #allocation4 [shape = 'u8[8192]{0}', space=vmem, size = 0x2000, scoped, tag = 'input window, operand 0']
    #allocation5 [shape = 's32[2]{0}', space=sflag, size = 0x8, scoped, tag = 'scoped memory for tpu_custom_call.1']
    #allocation6 [shape = 's32[2]{0}', space=sflag, size = 0x8, scoped, tag = 'scoped memory for tpu_custom_call.1']
    #allocation7 [shape = 'u8[16384]{0}', space=vmem, size = 0x4000, scoped, tag = 'input window, operand 1']
    #allocation8 [shape = 's32[2]{0}', space=sflag, size = 0x8, scoped, tag = 'scoped memory for tpu_custom_call.1']
    #allocation9 [shape = 'u8[16384]{0}', space=vmem, size = 0x4000, scoped, tag = 'input window, operand 2']
    #allocation10 [shape = 'u8[8192]{0}', space=vmem, size = 0x2000, scoped, tag = 'output window, operand 0']
    %8 = vsyncpa [#allocation5], 0
    %s9 = scalar_lea.sflag [#allocation5], 1
    %10 = vsyncpa %s9, 0
    %11 = vsyncpa [#allocation8], 0
    %s12 = scalar_lea.sflag [#allocation8], 1
    %13 = vsyncpa %s12, 0
    %14 = vsyncpa [#allocation6], 0
    %s15 = scalar_lea.sflag [#allocation6], 1
    %16 = vsyncpa %s15, 0
    loop: start=0, step=1, limit=4
    $region2: #{tpu_custom_call.1} parent=1 // loop_pre_header
      _
    $region3: #{tpu_custom_call.1} parent=1 // loop_header
      %s18 = sphi 0, %s22
      %p19 = scmp.ge.s32.totalorder %s18, 4
      %s25 = sphi 0, %s37
      %s26 = sphi 0, %s33
      %s27 = sphi 0, %s25
      %s28 = sphi 0, %s26
      %s29 = sphi 0, %s27
      %s30 = sphi 0, %s28
      %s42 = sphi 0, %s44
      %s45 = sphi 0, %s42
      %s46 = sphi 0, %s45
      %s62 = sphi 0, %s46
      %s68 = sphi 0, %s70
      %s71 = sphi 0, %s68
      %s72 = sphi 0, %s71
      %s88 = sphi 0, %s72
      %s94 = sphi 0, %s96
      %s97 = sphi 0, %s94
      %s98 = sphi 0, %s97
      %s114 = sphi 0, %s98
      %s122 = sphi 0, %s124
      %s125 = sphi 0, %s122
      %s126 = sphi 0, %s125
      %s142 = sphi 0, %s126
    $region4: #{tpu_custom_call.1} parent=1 // loop_header_branch
      %21 = sbr.rel (%p19) target = $region8
    $region5: #{tpu_custom_call.1} parent=1 // loop_body
      %s23 = ssub.s32 %s18, 1
      %s24 = ssub.s32 %s18, 2
      %s31 = sadd.s32 1, %s26
      %p32 = scmp.ge.s32.totalorder %s31, 1
      %s33 = scalar_select %p32, 0, %s31
      %s34 = sadd.s32 1, %s25
      %s35 = scalar_select %p32, %s34, %s25
      %p36 = scmp.ge.s32.totalorder %s35, 2
      %s37 = scalar_select %p36, 0, %s35
      %s38 = ssub.s32 %s26, %s33
      %s39 = ssub.s32 %s25, %s37
      %s40 = sor.u32 %s38, %s39
      %p41 = scmp.eq.s32.totalorder %s40, 0
      %s43 = sadd.s32 %s42, 1
      %s44 = scalar_select %p41, %s42, %s43
      %p47 = pneg %p41
      %p48 = scmp.eq.s32.totalorder %s18, 1
      %p49 = por %p47, %p48
      %p50 = scmp.ne.s32.totalorder %s42, %s45
      %p51 = scmp.eq.s32.totalorder %s18, 0
      %p52 = por %p50, %p51
      %p53 = scmp.ne.s32.totalorder %s42, %s45
      %p54 = scmp.eq.s32.totalorder %s23, 1
      %p55 = por %p53, %p54
      %p56 = scmp.ne.s32.totalorder %s45, %s46
      %p57 = scmp.eq.s32.totalorder %s23, 0
      %p58 = por %p56, %p57
      %p59 = scmp.ne.s32.totalorder %s45, %s46
      %p60 = scmp.eq.s32.totalorder %s24, 1
      %p61 = por %p59, %p60
      %p63 = scmp.ne.s32.totalorder %s46, %s62
      %p64 = scmp.eq.s32.totalorder %s24, 0
      %p65 = por %p63, %p64
      %s66 = ssub.s32 %s25, %s37
      %p67 = scmp.eq.s32.totalorder %s66, 0
      %s69 = sadd.s32 %s68, 1
      %s70 = scalar_select %p67, %s68, %s69
      %p73 = pneg %p67
      %p74 = scmp.eq.s32.totalorder %s18, 1
      %p75 = por %p73, %p74
      %p76 = scmp.ne.s32.totalorder %s68, %s71
      %p77 = scmp.eq.s32.totalorder %s18, 0
      %p78 = por %p76, %p77
      %p79 = scmp.ne.s32.totalorder %s68, %s71
      %p80 = scmp.eq.s32.totalorder %s23, 1
      %p81 = por %p79, %p80
      %p82 = scmp.ne.s32.totalorder %s71, %s72
      %p83 = scmp.eq.s32.totalorder %s23, 0
      %p84 = por %p82, %p83
      %p85 = scmp.ne.s32.totalorder %s71, %s72
      %p86 = scmp.eq.s32.totalorder %s24, 1
      %p87 = por %p85, %p86
      %p89 = scmp.ne.s32.totalorder %s72, %s88
      %p90 = scmp.eq.s32.totalorder %s24, 0
      %p91 = por %p89, %p90
      %s92 = ssub.s32 %s25, %s37
      %p93 = scmp.eq.s32.totalorder %s92, 0
      %s95 = sadd.s32 %s94, 1
      %s96 = scalar_select %p93, %s94, %s95
      %p99 = pneg %p93
      %p100 = scmp.eq.s32.totalorder %s18, 1
      %p101 = por %p99, %p100
      %p102 = scmp.ne.s32.totalorder %s94, %s97
      %p103 = scmp.eq.s32.totalorder %s18, 0
      %p104 = por %p102, %p103
      %p105 = scmp.ne.s32.totalorder %s94, %s97
      %p106 = scmp.eq.s32.totalorder %s23, 1
      %p107 = por %p105, %p106
      %p108 = scmp.ne.s32.totalorder %s97, %s98
      %p109 = scmp.eq.s32.totalorder %s23, 0
      %p110 = por %p108, %p109
      %p111 = scmp.ne.s32.totalorder %s97, %s98
      %p112 = scmp.eq.s32.totalorder %s24, 1
      %p113 = por %p111, %p112
      %p115 = scmp.ne.s32.totalorder %s98, %s114
      %p116 = scmp.eq.s32.totalorder %s24, 0
      %p117 = por %p115, %p116
      %s118 = ssub.s32 %s26, %s33
      %s119 = ssub.s32 %s25, %s37
      %s120 = sor.u32 %s118, %s119
      %p121 = scmp.eq.s32.totalorder %s120, 0
      %s123 = sadd.s32 %s122, 1
      %s124 = scalar_select %p121, %s122, %s123
      %p127 = pneg %p121
      %p128 = scmp.eq.s32.totalorder %s18, 1
      %p129 = por %p127, %p128
      %p130 = scmp.ne.s32.totalorder %s122, %s125
      %p131 = scmp.eq.s32.totalorder %s18, 0
      %p132 = por %p130, %p131
      %p133 = scmp.ne.s32.totalorder %s122, %s125
      %p134 = scmp.eq.s32.totalorder %s23, 1
      %p135 = por %p133, %p134
      %p136 = scmp.ne.s32.totalorder %s125, %s126
      %p137 = scmp.eq.s32.totalorder %s23, 0
      %p138 = por %p136, %p137
      %p139 = scmp.ne.s32.totalorder %s125, %s126
      %p140 = scmp.eq.s32.totalorder %s24, 1
      %p141 = por %p139, %p140
      %p143 = scmp.ne.s32.totalorder %s126, %s142
      %p144 = scmp.eq.s32.totalorder %s24, 0
      %p145 = por %p143, %p144
      %p146 = scmp.le.s32.totalorder 1, %s18
      %p147 = scmp.lt.s32.totalorder %s18, 3
      %p148 = pnand %p146, %p147
      %p149 = pneg %p148
      // Predicated region
      $region9: #{tpu_custom_call.1} parent=5 // pred_check
        _
      $region10: #{tpu_custom_call.1} parent=5 // pred_check_branch
        %151 = sbr.rel (%p148) target = $region12
      $region11: #{tpu_custom_call.1} parent=5 // pred_region
        %s152 = ssub.s32 %s18, 1
      $region12: #{tpu_custom_call.1} parent=5 // pred_fallthru
        _
      %p153 = scmp.lt.s32.totalorder %s18, 2
      // Predicated region
      $region13: #{tpu_custom_call.1} parent=5 // pred_check
        %p154 = pneg %p153
      $region14: #{tpu_custom_call.1} parent=5 // pred_check_branch
        %156 = sbr.rel (%p154) target = $region16
      $region15: #{tpu_custom_call.1} parent=5 // pred_region
        // Predicated region
        $region17: #{tpu_custom_call.1} parent=15 // pred_check
          %p157 = pneg %p52
        $region18: #{tpu_custom_call.1} parent=15 // pred_check_branch
          %159 = sbr.rel (%p157) target = $region20
        $region19: #{tpu_custom_call.1} parent=15 // pred_region
          %s160 = sand.u32 %s42, 1
          %s161 = scalar_lea.sflag [#allocation5], %s160
          %s162 = sand.u32 %s42, 1
          %s163 = smul.addr %s162, 8
          %s164 = scalar_lea.vmem [#allocation4], %s163
          %s165 = smul.u32 2, %s26
          %s167 = ssub.s32 128, 128
          %168 = vsyncadd %s161, %s167
          %s169 = smul.addr %s165, 2
          %s170 = sadd.s32 %s25, %s169
          %s171 = smul.addr %s170, 64
          %s172 = scalar_lea.hbm %s0, %s171
          %s173 = sshll.u32 %s164, 4
          %s174 = int_to_ptr.vmem [resolvable:$true] %s173
          %179 = dma.hbm_to_vmem [thread:$0]  %s172, 128, %s174, %s161, 128, 64, 4
        $region20: #{tpu_custom_call.1} parent=15 // pred_fallthru
          _
        // Predicated region
        $region21: #{tpu_custom_call.1} parent=15 // pred_check
          %p180 = pneg %p78
        $region22: #{tpu_custom_call.1} parent=15 // pred_check_branch
          %182 = sbr.rel (%p180) target = $region24
        $region23: #{tpu_custom_call.1} parent=15 // pred_region
          %s183 = sand.u32 %s18, 1
          %s184 = scalar_lea.sflag [#allocation8], %s183
          %s185 = sand.u32 %s68, 1
          %s186 = smul.addr %s185, 16
          %s187 = scalar_lea.vmem [#allocation7], %s186
          %s189 = ssub.s32 256, 256
          %190 = vsyncadd %s184, %s189
          %s191 = smul.addr %s25, 64
          %s192 = scalar_lea.hbm %s1, %s191
          %s193 = sshll.u32 %s187, 4
          %s194 = int_to_ptr.vmem [resolvable:$true] %s193
          %199 = dma.hbm_to_vmem [thread:$0]  %s192, 256, %s194, %s184, 128, 64, 4
        $region24: #{tpu_custom_call.1} parent=15 // pred_fallthru
          _
        // Predicated region
        $region25: #{tpu_custom_call.1} parent=15 // pred_check
          %p200 = pneg %p104
        $region26: #{tpu_custom_call.1} parent=15 // pred_check_branch
          %202 = sbr.rel (%p200) target = $region28
        $region27: #{tpu_custom_call.1} parent=15 // pred_region
          %s203 = sand.u32 %s18, 1
          %s204 = scalar_lea.sflag [#allocation8], %s203
          %s205 = sand.u32 %s94, 1
          %s206 = smul.addr %s205, 16
          %s207 = scalar_lea.vmem [#allocation9], %s206
          %s209 = ssub.s32 256, 256
          %210 = vsyncadd %s204, %s209
          %s211 = smul.addr %s25, 64
          %s212 = scalar_lea.hbm %s2, %s211
          %s213 = sshll.u32 %s207, 4
          %s214 = int_to_ptr.vmem [resolvable:$true] %s213
          %219 = dma.hbm_to_vmem [thread:$0]  %s212, 256, %s214, %s204, 128, 64, 4
        $region28: #{tpu_custom_call.1} parent=15 // pred_fallthru
          _
      $region16: #{tpu_custom_call.1} parent=5 // pred_fallthru
        _
      %p220 = scmp.le.s32.totalorder 1, %s18
      %p221 = scmp.lt.s32.totalorder %s18, 3
      %p222 = pnand %p220, %p221
      %p223 = pneg %p222
      // Predicated region
      $region29: #{tpu_custom_call.1} parent=5 // pred_check
        _
      $region30: #{tpu_custom_call.1} parent=5 // pred_check_branch
        %225 = sbr.rel (%p222) target = $region32
      $region31: #{tpu_custom_call.1} parent=5 // pred_region
        %s226 = ssub.s32 %s18, 1
        %s227 = sand.u32 %s45, 1
        %s228 = scalar_lea.sflag [#allocation5], %s227
        %s229 = sand.u32 %s45, 1
        %s230 = smul.addr %s229, 8
        %s231 = scalar_lea.vmem [#allocation4], %s230
        // Predicated region
        $region33: #{tpu_custom_call.1} parent=31 // pred_check
          %p232 = pneg %p58
        $region34: #{tpu_custom_call.1} parent=31 // pred_check_branch
          %234 = sbr.rel (%p232) target = $region36
        $region35: #{tpu_custom_call.1} parent=31 // pred_region
          %235 = dma.done %s228, 128
        $region36: #{tpu_custom_call.1} parent=31 // pred_fallthru
          _
        %s236 = sand.u32 %s23, 1
        %s237 = scalar_lea.sflag [#allocation8], %s236
        %s238 = sand.u32 %s71, 1
        %s239 = smul.addr %s238, 16
        %s240 = scalar_lea.vmem [#allocation7], %s239
        // Predicated region
        $region37: #{tpu_custom_call.1} parent=31 // pred_check
          %p241 = pneg %p84
        $region38: #{tpu_custom_call.1} parent=31 // pred_check_branch
          %243 = sbr.rel (%p241) target = $region40
        $region39: #{tpu_custom_call.1} parent=31 // pred_region
          %244 = dma.done %s237, 256
        $region40: #{tpu_custom_call.1} parent=31 // pred_fallthru
          _
        %s245 = sand.u32 %s23, 1
        %s246 = scalar_lea.sflag [#allocation8], %s245
        %s247 = sand.u32 %s97, 1
        %s248 = smul.addr %s247, 16
        %s249 = scalar_lea.vmem [#allocation9], %s248
        // Predicated region
        $region41: #{tpu_custom_call.1} parent=31 // pred_check
          %p250 = pneg %p110
        $region42: #{tpu_custom_call.1} parent=31 // pred_check_branch
          %252 = sbr.rel (%p250) target = $region44
        $region43: #{tpu_custom_call.1} parent=31 // pred_region
          %253 = dma.done %s246, 256
        $region44: #{tpu_custom_call.1} parent=31 // pred_fallthru
          _
        %s254 = sand.u32 %s45, 1
        %s255 = scalar_lea.sflag [#allocation5], %s254
        %s256 = sand.u32 %s45, 1
        %s257 = smul.addr %s256, 8
        %s258 = scalar_lea.vmem [#allocation4], %s257
        %p259 = pneg %p58
        %p260 = pneg %p55
        %s261 = sand.u32 %s23, 1
        %s262 = scalar_lea.sflag [#allocation8], %s261
        %s263 = sand.u32 %s71, 1
        %s264 = smul.addr %s263, 16
        %s265 = scalar_lea.vmem [#allocation7], %s264
        %p266 = pneg %p84
        %p267 = pneg %p81
        %s268 = sand.u32 %s23, 1
        %s269 = scalar_lea.sflag [#allocation8], %s268
        %s270 = sand.u32 %s97, 1
        %s271 = smul.addr %s270, 16
        %s272 = scalar_lea.vmem [#allocation9], %s271
        %p273 = pneg %p110
        %p274 = pneg %p107
        %p275 = pneg %p138
        %p276 = pneg %p135
        %s277 = sand.u32 %s125, 1
        %s278 = scalar_lea.sflag [#allocation6], %s277
        %s279 = sand.u32 %s125, 1
        %s280 = smul.addr %s279, 8
        %s281 = scalar_lea.vmem [#allocation10], %s280
        %s282 = smul.u32 2, %s28
        %s283 = smul.u32 2, %s28
        %p284 = scmp.eq.s32.totalorder %s28, 0
        // Predicated region
        $region45: #{tpu_custom_call.1} parent=31 // pred_check
          %p285 = pneg %p284
        $region46: #{tpu_custom_call.1} parent=31 // pred_check_branch
          %287 = sbr.rel (%p285) target = $region48
        $region47: #{tpu_custom_call.1} parent=31 // pred_region
          %v288 = vld [vmem:[%s249] sm:$0xf]
          %v289 = vld [vmem:[%s249 + $0x4] sm:$0xf]
          %v290 = vld [vmem:[%s249 + $0x8] sm:$0xf]
          %v291 = vld [vmem:[%s249 + $0xc] sm:$0xf]
          %v292 = vmul.f32 %v288, -2.0
          %v293 = vmul.f32 %v289, -2.0
          %v294 = vmul.f32 %v290, -2.0
          %v295 = vmul.f32 %v291, -2.0
          %v296 = vmul.f32 %v292, 1.442695
          %v297 = vpow.pop %v296
          %v298 = vmul.f32 %v293, 1.442695
          %v299 = vpow.pop %v298
          %v300 = vmul.f32 %v294, 1.442695
          %v301 = vpow.pop %v300
          %v302 = vmul.f32 %v295, 1.442695
          %v303 = vpow.pop %v302
          %v304 = vmul.f32 %v297, -0.5
          %v305 = vmul.f32 %v299, -0.5
          %v306 = vmul.f32 %v301, -0.5
          %v307 = vmul.f32 %v303, -0.5
          %308 = vst [vmem:[#allocation2] sm:$0xf] %v304
          %309 = vst [vmem:[#allocation2 + $0x4] sm:$0xf] %v305
          %310 = vst [vmem:[#allocation2 + $0x8] sm:$0xf] %v306
          %311 = vst [vmem:[#allocation2 + $0xc] sm:$0xf] %v307
          %v312 = vsub.f32 0.0, %v288
          %v313 = vsub.f32 0.0, %v289
          %v314 = vsub.f32 0.0, %v290
          %v315 = vsub.f32 0.0, %v291
          %v316 = vsub.f32 %v312, 0.9189385
          %v317 = vsub.f32 %v313, 0.9189385
          %v318 = vsub.f32 %v314, 0.9189385
          %v319 = vsub.f32 %v315, 0.9189385
          %320 = vst [vmem:[#allocation3] sm:$0xf] %v316
          %321 = vst [vmem:[#allocation3 + $0x4] sm:$0xf] %v317
          %322 = vst [vmem:[#allocation3 + $0x8] sm:$0xf] %v318
          %323 = vst [vmem:[#allocation3 + $0xc] sm:$0xf] %v319
        $region48: #{tpu_custom_call.1} parent=31 // pred_fallthru
          _
        %v324 = vld [vmem:[%s231] sm:$0x1]
        %vm325 = vcmp.ne.f32.partialorder %v324, %v324
        %v326 = vld [vmem:[%s240] sm:$0xf]
        %v327 = vlaneseq
        %v328 = vshrl.u32 %v327, 7
        %v329 = vsub.s32 0, %v328
        %v330 = vrot.slane %v324, %v329
        %v331 = vsub.f32 %v330, %v326
        %v332 = vmul.f32 %v331, %v331
        %v333 = vld [vmem:[#allocation2] sm:$0xf]
        %v334 = vmul.f32 %v332, %v333
        %v335 = vld [vmem:[#allocation3] sm:$0xf]
        %v336 = vadd.f32 %v334, %v335
        %v337 = vsel %vm325, 1, 0
        %v338 = vlaneseq
        %v339 = vshrl.u32 %v338, 7
        %v340 = vsub.s32 0, %v339
        %v341 = vrot.slane %v337, %v340
        %vm342 = vcmp.eq.s32.totalorder %v341, 1
        %v343 = vsel %vm342, 0.0, %v336
        %v344 = vld [vmem:[%s231 + $0x1] sm:$0x1]
        %vm345 = vcmp.ne.f32.partialorder %v344, %v344
        %s346 = scalar_lea.vmem %s240, 4 [#allocation7]
        %v347 = vld [vmem:[%s346] sm:$0xf]
        %v348 = vlaneseq
        %v349 = vshrl.u32 %v348, 7
        %v350 = vsub.s32 0, %v349
        %v351 = vrot.slane %v344, %v350
        %v352 = vsub.f32 %v351, %v347
        %v353 = vmul.f32 %v352, %v352
        %s354 = scalar_lea.vmem [#allocation2], 4
        %v355 = vld [vmem:[%s354] sm:$0xf]
        %v356 = vmul.f32 %v353, %v355
        %s357 = scalar_lea.vmem [#allocation3], 4
        %v358 = vld [vmem:[%s357] sm:$0xf]
        %v359 = vadd.f32 %v356, %v358
        %v360 = vsel %vm345, 1, 0
        %v361 = vlaneseq
        %v362 = vshrl.u32 %v361, 7
        %v363 = vsub.s32 0, %v362
        %v364 = vrot.slane %v360, %v363
        %vm365 = vcmp.eq.s32.totalorder %v364, 1
        %v366 = vsel %vm365, 0.0, %v359
        %v367 = vadd.f32 %v343, %v366
        %v368 = vld [vmem:[%s231 + $0x2] sm:$0x1]
        %vm369 = vcmp.ne.f32.partialorder %v368, %v368
        %s370 = scalar_lea.vmem %s240, 8 [#allocation7]
        %v371 = vld [vmem:[%s370] sm:$0xf]
        %v372 = vlaneseq
        %v373 = vshrl.u32 %v372, 7
        %v374 = vsub.s32 0, %v373
        %v375 = vrot.slane %v368, %v374
        %v376 = vsub.f32 %v375, %v371
        %v377 = vmul.f32 %v376, %v376
        %s378 = scalar_lea.vmem [#allocation2], 8
        %v379 = vld [vmem:[%s378] sm:$0xf]
        %v380 = vmul.f32 %v377, %v379
        %s381 = scalar_lea.vmem [#allocation3], 8
        %v382 = vld [vmem:[%s381] sm:$0xf]
        %v383 = vadd.f32 %v380, %v382
        %v384 = vsel %vm369, 1, 0
        %v385 = vlaneseq
        %v386 = vshrl.u32 %v385, 7
        %v387 = vsub.s32 0, %v386
        %v388 = vrot.slane %v384, %v387
        %vm389 = vcmp.eq.s32.totalorder %v388, 1
        %v390 = vsel %vm389, 0.0, %v383
        %v391 = vadd.f32 %v367, %v390
        %v392 = vld [vmem:[%s231 + $0x3] sm:$0x1]
        %vm393 = vcmp.ne.f32.partialorder %v392, %v392
        %s394 = scalar_lea.vmem %s240, 12 [#allocation7]
        %v395 = vld [vmem:[%s394] sm:$0xf]
        %v396 = vlaneseq
        %v397 = vshrl.u32 %v396, 7
        %v398 = vsub.s32 0, %v397
        %v399 = vrot.slane %v392, %v398
        %v400 = vsub.f32 %v399, %v395
        %v401 = vmul.f32 %v400, %v400
        %s402 = scalar_lea.vmem [#allocation2], 12
        %v403 = vld [vmem:[%s402] sm:$0xf]
        %v404 = vmul.f32 %v401, %v403
        %s405 = scalar_lea.vmem [#allocation3], 12
        %v406 = vld [vmem:[%s405] sm:$0xf]
        %v407 = vadd.f32 %v404, %v406
        %v408 = vsel %vm393, 1, 0
        %v409 = vlaneseq
        %v410 = vshrl.u32 %v409, 7
        %v411 = vsub.s32 0, %v410
        %v412 = vrot.slane %v408, %v411
        %vm413 = vcmp.eq.s32.totalorder %v412, 1
        %v414 = vsel %vm413, 0.0, %v407
        %v415 = vadd.f32 %v391, %v414
        %416 = vst [vmem:[%s281] sm:$0xf] %v415
        %s417 = scalar_lea.vmem %s231, 4 [#allocation4]
        %v418 = vld [vmem:[%s417] sm:$0x1]
        %vm419 = vcmp.ne.f32.partialorder %v418, %v418
        %v420 = vld [vmem:[%s240] sm:$0xf]
        %v421 = vlaneseq
        %v422 = vshrl.u32 %v421, 7
        %v423 = vsub.s32 0, %v422
        %v424 = vrot.slane %v418, %v423
        %v425 = vsub.f32 %v424, %v420
        %v426 = vmul.f32 %v425, %v425
        %v427 = vld [vmem:[#allocation2] sm:$0xf]
        %v428 = vmul.f32 %v426, %v427
        %v429 = vld [vmem:[#allocation3] sm:$0xf]
        %v430 = vadd.f32 %v428, %v429
        %v431 = vsel %vm419, 1, 0
        %v432 = vlaneseq
        %v433 = vshrl.u32 %v432, 7
        %v434 = vsub.s32 0, %v433
        %v435 = vrot.slane %v431, %v434
        %vm436 = vcmp.eq.s32.totalorder %v435, 1
        %v437 = vsel %vm436, 0.0, %v430
        %v438 = vld [vmem:[%s417 + $0x1] sm:$0x1]
        %vm439 = vcmp.ne.f32.partialorder %v438, %v438
        %v440 = vld [vmem:[%s346] sm:$0xf]
        %v441 = vlaneseq
        %v442 = vshrl.u32 %v441, 7
        %v443 = vsub.s32 0, %v442
        %v444 = vrot.slane %v438, %v443
        %v445 = vsub.f32 %v444, %v440
        %v446 = vmul.f32 %v445, %v445
        %v447 = vld [vmem:[%s354] sm:$0xf]
        %v448 = vmul.f32 %v446, %v447
        %v449 = vld [vmem:[%s357] sm:$0xf]
        %v450 = vadd.f32 %v448, %v449
        %v451 = vsel %vm439, 1, 0
        %v452 = vlaneseq
        %v453 = vshrl.u32 %v452, 7
        %v454 = vsub.s32 0, %v453
        %v455 = vrot.slane %v451, %v454
        %vm456 = vcmp.eq.s32.totalorder %v455, 1
        %v457 = vsel %vm456, 0.0, %v450
        %v458 = vadd.f32 %v437, %v457
        %v459 = vld [vmem:[%s417 + $0x2] sm:$0x1]
        %vm460 = vcmp.ne.f32.partialorder %v459, %v459
        %v461 = vld [vmem:[%s370] sm:$0xf]
        %v462 = vlaneseq
        %v463 = vshrl.u32 %v462, 7
        %v464 = vsub.s32 0, %v463
        %v465 = vrot.slane %v459, %v464
        %v466 = vsub.f32 %v465, %v461
        %v467 = vmul.f32 %v466, %v466
        %v468 = vld [vmem:[%s378] sm:$0xf]
        %v469 = vmul.f32 %v467, %v468
        %v470 = vld [vmem:[%s381] sm:$0xf]
        %v471 = vadd.f32 %v469, %v470
        %v472 = vsel %vm460, 1, 0
        %v473 = vlaneseq
        %v474 = vshrl.u32 %v473, 7
        %v475 = vsub.s32 0, %v474
        %v476 = vrot.slane %v472, %v475
        %vm477 = vcmp.eq.s32.totalorder %v476, 1
        %v478 = vsel %vm477, 0.0, %v471
        %v479 = vadd.f32 %v458, %v478
        %v480 = vld [vmem:[%s417 + $0x3] sm:$0x1]
        %vm481 = vcmp.ne.f32.partialorder %v480, %v480
        %v482 = vld [vmem:[%s394] sm:$0xf]
        %v483 = vlaneseq
        %v484 = vshrl.u32 %v483, 7
        %v485 = vsub.s32 0, %v484
        %v486 = vrot.slane %v480, %v485
        %v487 = vsub.f32 %v486, %v482
        %v488 = vmul.f32 %v487, %v487
        %v489 = vld [vmem:[%s402] sm:$0xf]
        %v490 = vmul.f32 %v488, %v489
        %v491 = vld [vmem:[%s405] sm:$0xf]
        %v492 = vadd.f32 %v490, %v491
        %v493 = vsel %vm481, 1, 0
        %v494 = vlaneseq
        %v495 = vshrl.u32 %v494, 7
        %v496 = vsub.s32 0, %v495
        %v497 = vrot.slane %v493, %v496
        %vm498 = vcmp.eq.s32.totalorder %v497, 1
        %v499 = vsel %vm498, 0.0, %v492
        %v500 = vadd.f32 %v479, %v499
        %s501 = scalar_lea.vmem %s281, 4 [#allocation10]
        %502 = vst [vmem:[%s501] sm:$0xf] %v500
        %s503 = sand.u32 %s125, 1
        %s504 = scalar_lea.sflag [#allocation6], %s503
        %s505 = sand.u32 %s125, 1
        %s506 = smul.addr %s505, 8
        %s507 = scalar_lea.vmem [#allocation10], %s506
        // Predicated region
        $region49: #{tpu_custom_call.1} parent=31 // pred_check
          %p508 = pneg %p135
        $region50: #{tpu_custom_call.1} parent=31 // pred_check_branch
          %510 = sbr.rel (%p508) target = $region52
        $region51: #{tpu_custom_call.1} parent=31 // pred_region
          %s511 = smul.u32 2, %s28
          %s513 = ssub.s32 128, 128
          %514 = vsyncadd %s504, %s513
          %s515 = smul.addr %s511, 2
          %s516 = sadd.s32 %s27, %s515
          %s517 = smul.addr %s516, 64
          %s518 = scalar_lea.hbm %s3, %s517
          %s519 = sshll.u32 %s507, 4
          %s520 = int_to_ptr.vmem [resolvable:$true] %s519
          %525 = dma.vmem_to_hbm [thread:$0]  %s520, 128, %s518, %s504, 64, 128, 4
        $region52: #{tpu_custom_call.1} parent=31 // pred_fallthru
          _
      $region32: #{tpu_custom_call.1} parent=5 // pred_fallthru
        _
      %p526 = scmp.le.s32.totalorder 2, %s18
      // Predicated region
      $region53: #{tpu_custom_call.1} parent=5 // pred_check
        %p527 = pneg %p526
      $region54: #{tpu_custom_call.1} parent=5 // pred_check_branch
        %529 = sbr.rel (%p527) target = $region56
      $region55: #{tpu_custom_call.1} parent=5 // pred_region
        %s530 = ssub.s32 %s18, 2
        // Predicated region
        $region57: #{tpu_custom_call.1} parent=55 // pred_check
          %p531 = pneg %p141
        $region58: #{tpu_custom_call.1} parent=55 // pred_check_branch
          %533 = sbr.rel (%p531) target = $region60
        $region59: #{tpu_custom_call.1} parent=55 // pred_region
          %s534 = sand.u32 %s126, 1
          %s535 = scalar_lea.sflag [#allocation6], %s534
          %s536 = sand.u32 %s126, 1
          %s537 = smul.addr %s536, 8
          %s538 = scalar_lea.vmem [#allocation10], %s537
          %539 = dma.done %s535, 128
        $region60: #{tpu_custom_call.1} parent=55 // pred_fallthru
          _
      $region56: #{tpu_custom_call.1} parent=5 // pred_fallthru
        _
    $region6: #{tpu_custom_call.1} parent=1 // loop_footer
      %s22 = sadd.s32 1, %s18
    $region7: #{tpu_custom_call.1} parent=1 // loop_footer_branch
      %17 = sbr.rel target = $region3
    $region8: #{tpu_custom_call.1} parent=1 // loop_exit
      _
    %540 = vsyncpa [#allocation5], 1
    %s541 = scalar_lea.sflag [#allocation5], 1
    %542 = vsyncpa %s541, 1
    %543 = vsyncpa [#allocation8], 1
    %s544 = scalar_lea.sflag [#allocation8], 1
    %545 = vsyncpa %s544, 1
    %546 = vsyncpa [#allocation6], 1
    %s547 = scalar_lea.sflag [#allocation6], 1
    %548 = vsyncpa %s547, 1

</llo_original>
